<compile_context>
chip_gen: v6e
topology: v6e:2x2x1
jax: 0.10.0
libtpu: 0.0.40
codegen_flags: <defaults>
</compile_context>

<pallas_src>
import math

import jax
import jax.numpy as jnp
from jax.experimental import pallas as pl
from jax.experimental.pallas import tpu as pltpu

FEAT = 2
NUM_CLASSES = 10


def xeloss_kernel(x_ref, w_ref, label_ref, out_ref, loss_ref):
    x = x_ref[...]                     # (N, F)  f32, VMEM
    w = w_ref[...]                     # (F, C)  f32, VMEM
    label = label_ref[...]             # (N, 1)  int32, VMEM

    n_rows, n_feat = x.shape

    # ---- out = x @ w, expanded on the VPU (K = F = 2) ----------------------
    # (N,1) * (1,C) broadcast FMAs; strictly cheaper than an MXU matmul with a
    # contraction dim of 2.
    out = x[:, 0:1] * w[0:1, :]
    for f in range(1, n_feat):
        out = out + x[:, f:f + 1] * w[f:f + 1, :]          # (N, C)
    out_ref[...] = out

    # ---- cross entropy (mean reduction) ------------------------------------
    # loss_i = logsumexp(out_i) - out_i[label_i]; row_max cancels, so work on
    # the shifted logits throughout.
    row_max = jnp.max(out, axis=1, keepdims=True)                      # (N, 1)
    shifted = out - row_max                                            # (N, C)
    lse = jnp.log(jnp.sum(jnp.exp(shifted), axis=1, keepdims=True))    # (N, 1)

    cls = jax.lax.broadcasted_iota(jnp.int32, out.shape, 1)            # (N, C)
    onehot = (cls == label).astype(jnp.float32)
    target_shifted = jnp.sum(shifted * onehot, axis=1, keepdims=True)  # (N, 1)

    n = jnp.float32(n_rows)
    loss_ref[0, 0] = jnp.sum(lse - target_shifted) / n


def xeloss_forward(x, weight, label):
    """Pallas implementation of XELoss.forward(x, label) -> (out, loss)."""
    if x.dtype != jnp.float32:
        x = x.astype(jnp.float32)
    if weight.dtype != jnp.float32:
        weight = weight.astype(jnp.float32)

    N, _ = x.shape
    C = weight.shape[1]
    label2d = label.reshape(N, 1)
    if label2d.dtype != jnp.int32:
        label2d = label2d.astype(jnp.int32)

    out, loss = pl.pallas_call(
        xeloss_kernel,
        out_shape=(jax.ShapeDtypeStruct((N, C), jnp.float32),
                   jax.ShapeDtypeStruct((1, 1), jnp.float32)),
        in_specs=[pl.BlockSpec(memory_space=pltpu.MemorySpace.VMEM),
                  pl.BlockSpec(memory_space=pltpu.MemorySpace.VMEM),
                  pl.BlockSpec(memory_space=pltpu.MemorySpace.VMEM)],
        out_specs=(pl.BlockSpec(memory_space=pltpu.MemorySpace.VMEM),
                   pl.BlockSpec(memory_space=pltpu.MemorySpace.SMEM)),
    )(x, weight, label2d)
    return out, loss[0, 0]


def init_weight(key):
    """Replicates nn.init.xavier_normal_ on a (2, 10) parameter."""
    fan_out, fan_in = FEAT, NUM_CLASSES      # torch: fan_in=shape[1], fan_out=shape[0]
    std = math.sqrt(2.0 / (fan_in + fan_out))
    return jax.random.normal(key, (FEAT, NUM_CLASSES), jnp.float32) * std


def _reference(x, weight, label):
    out = x @ weight
    logp = jax.nn.log_softmax(out, axis=-1)
    loss = -jnp.mean(jnp.take_along_axis(logp, label[:, None], axis=1))
    return out, loss


if __name__ == "__main__":
    key = jax.random.PRNGKey(0)
    k_w, k_x, k_l = jax.random.split(key, 3)

    N = 8
    weight = init_weight(k_w)                                   # (2, 10)
    x = jax.random.normal(k_x, (N, FEAT), jnp.float32)          # (8, 2)
    label = jax.random.randint(k_l, (N,), 0, NUM_CLASSES, jnp.int32)

    out, loss = xeloss_forward(x, weight, label)
    jax.block_until_ready((out, loss))

    ref_out, ref_loss = _reference(x, weight, label)
    assert jnp.allclose(out, ref_out, rtol=1e-5, atol=1e-5)
    assert jnp.allclose(loss, ref_loss, rtol=1e-5, atol=1e-5)

    print("KERNEL_OK")
</pallas_src>

<mosaic_0001>
module attributes {stable_mosaic.version = 11 : i64} {
  func.func @xeloss_kernel(%arg0: memref<8x2xf32, #tpu.memory_space<vmem>>, %arg1: memref<2x10xf32, #tpu.memory_space<vmem>>, %arg2: memref<8x1xi32, #tpu.memory_space<vmem>>, %arg3: memref<8x10xf32, #tpu.memory_space<vmem>>, %arg4: memref<1x1xf32, #tpu.memory_space<smem>>) attributes {dimension_semantics = [], scalar_prefetch = 0 : i64, scratch_operands = 0 : i64, tpu.core_type = #tpu.core_type<tc>} {
    %c0 = arith.constant 0 : index
    %c0_0 = arith.constant 0 : index
    %0 = vector.load %arg0[%c0, %c0_0] : memref<8x2xf32, #tpu.memory_space<vmem>>, vector<8x2xf32>
    %c0_1 = arith.constant 0 : index
    %c0_2 = arith.constant 0 : index
    %1 = vector.load %arg1[%c0_1, %c0_2] : memref<2x10xf32, #tpu.memory_space<vmem>>, vector<2x10xf32>
    %c0_3 = arith.constant 0 : index
    %c0_4 = arith.constant 0 : index
    %2 = vector.load %arg2[%c0_3, %c0_4] : memref<8x1xi32, #tpu.memory_space<vmem>>, vector<8x1xi32>
    %3 = vector.extract_strided_slice %0 {offsets = [0, 0], sizes = [8, 1], strides = [1, 1]} : vector<8x2xf32> to vector<8x1xf32>
    %4 = vector.extract_strided_slice %1 {offsets = [0, 0], sizes = [1, 10], strides = [1, 1]} : vector<2x10xf32> to vector<1x10xf32>
    %5 = vector.broadcast %3 : vector<8x1xf32> to vector<8x10xf32>
    %6 = vector.broadcast %4 : vector<1x10xf32> to vector<8x10xf32>
    %7 = arith.mulf %5, %6 : vector<8x10xf32>
    %8 = vector.extract_strided_slice %0 {offsets = [0, 1], sizes = [8, 1], strides = [1, 1]} : vector<8x2xf32> to vector<8x1xf32>
    %9 = vector.extract_strided_slice %1 {offsets = [1, 0], sizes = [1, 10], strides = [1, 1]} : vector<2x10xf32> to vector<1x10xf32>
    %10 = vector.broadcast %8 : vector<8x1xf32> to vector<8x10xf32>
    %11 = vector.broadcast %9 : vector<1x10xf32> to vector<8x10xf32>
    %12 = arith.mulf %10, %11 : vector<8x10xf32>
    %13 = arith.addf %7, %12 : vector<8x10xf32>
    %c0_5 = arith.constant 0 : index
    %c0_6 = arith.constant 0 : index
    %14 = vector.load %arg3[%c0_5, %c0_6] : memref<8x10xf32, #tpu.memory_space<vmem>>, vector<8x10xf32>
    tpu.vector_store %arg3[%c0_5, %c0_6], %13 {strides = array<i32>} : memref<8x10xf32, #tpu.memory_space<vmem>>, vector<8x10xf32>,
    %cst = arith.constant dense<0xFF800000> : vector<8xf32>
    %15 = vector.multi_reduction <maximumf>, %13, %cst [1] : vector<8x10xf32> to vector<8xf32>
    %16 = vector.shape_cast %15 : vector<8xf32> to vector<8x1xf32>
    %17 = vector.broadcast %16 : vector<8x1xf32> to vector<8x10xf32>
    %18 = arith.subf %13, %17 : vector<8x10xf32>
    %19 = math.exp %18 : vector<8x10xf32>
    %cst_7 = arith.constant dense<0.000000e+00> : vector<8xf32>
    %20 = vector.multi_reduction <add>, %19, %cst_7 [1] : vector<8x10xf32> to vector<8xf32>
    %21 = vector.shape_cast %20 : vector<8xf32> to vector<8x1xf32>
    %22 = math.log %21 : vector<8x1xf32>
    %23 = tpu.iota {dimensions = array<i32: 1>} : vector<8x10xi32>
    %24 = vector.broadcast %2 : vector<8x1xi32> to vector<8x10xi32>
    %25 = arith.cmpi eq, %23, %24 : vector<8x10xi32>
    %26 = arith.extui %25 : vector<8x10xi1> to vector<8x10xi32>
    %27 = arith.sitofp %26 : vector<8x10xi32> to vector<8x10xf32>
    %28 = arith.mulf %18, %27 : vector<8x10xf32>
    %cst_8 = arith.constant dense<0.000000e+00> : vector<8xf32>
    %29 = vector.multi_reduction <add>, %28, %cst_8 [1] : vector<8x10xf32> to vector<8xf32>
    %30 = vector.shape_cast %29 : vector<8xf32> to vector<8x1xf32>
    %31 = arith.subf %22, %30 : vector<8x1xf32>
    %32 = vector.shape_cast %31 : vector<8x1xf32> to vector<1x8x1xf32>
    %cst_9 = arith.constant dense<0.000000e+00> : vector<1xf32>
    %33 = vector.multi_reduction <add>, %32, %cst_9 [1, 2] : vector<1x8x1xf32> to vector<1xf32>
    %34 = vector.shape_cast %33 : vector<1xf32> to vector<1x1x1xf32>
    %35 = vector.extract %34[0, 0, 0] : f32 from vector<1x1x1xf32>
    %cst_10 = arith.constant 8.000000e+00 : f32
    %36 = arith.divf %35, %cst_10 : f32
    %c0_11 = arith.constant 0 : index
    %c0_12 = arith.constant 0 : index
    %37 = memref.load %arg4[%c0_11, %c0_12] : memref<1x1xf32, #tpu.memory_space<smem>>
    memref.store %36, %arg4[%c0_11, %c0_12] : memref<1x1xf32, #tpu.memory_space<smem>>
    return
  }
}

</mosaic_0001>

<llo_original>
// kernel: tpu_custom_call.1
$region0: #{tpu_custom_call.1}
  #allocation0 [shape = 'u32[]', space=smem, size = 0x4, offset = 0x4, fixed_abs, tag = 'smem constant byte address 0x4 - core index']
  #allocation1 [shape = 'u32[144,128]{1,0:T(1,128)}', space=vmem, size = 0x12000, scoped, tag = 'internal scratch']
  %s0 = inlined_call_operand.vmem [shape: f32[8,2], index: 0, kind: input, shape index: {}]
  %s1 = inlined_call_operand.vmem [shape: f32[2,10], index: 1, kind: input, shape index: {}]
  %s2 = inlined_call_operand.vmem [shape: s32[8,1], index: 2, kind: input, shape index: {}]
  %s3 = inlined_call_operand.hbm [shape: f32[8,10], index: 3, kind: output, shape index: {0}]
  %s4 = inlined_call_operand.hbm [shape: f32[1,1], index: 4, kind: output, shape index: {1}]
  %5 = xla_tuple %s3, %s4
  %s6 = sld [smem:[#allocation0]]
  $region30: #{tpu_custom_call.1} parent=0
    _
  %s8 = ssub.s32 1, %s6
  %s9 = scalar_select 0, %s8, %s6
  $region1: #{tpu_custom_call.1} parent=0
    #allocation2 [shape = 'u8[4096]{0}', space=vmem, size = 0x1000, scoped, tag = 'output window, operand 0, single buffered']
    #allocation3 [shape = 's32[1]{0}', space=sflag, size = 0x4, scoped, tag = 'scoped memory for tpu_custom_call.1']
    #allocation4 [shape = 's32[1]{0}', space=sflag, size = 0x4, scoped, tag = 'scoped memory for tpu_custom_call.1']
    #allocation5 [shape = 'u8[512]{0}', space=smem, size = 0x200, scoped, tag = 'output window, operand 1, single buffered']
    %10 = vsyncpa [#allocation3], 0
    %11 = vsyncpa [#allocation4], 0
    // Predicated region
    $region2: #{tpu_custom_call.1} parent=1 // pred_check
      _
    $region3: #{tpu_custom_call.1} parent=1 // pred_check_branch
      %13 = sbr.rel (0) target = $region5
    $region4: #{tpu_custom_call.1} parent=1 // pred_region
      _
    $region5: #{tpu_custom_call.1} parent=1 // pred_fallthru
      _
    // Predicated region
    $region6: #{tpu_custom_call.1} parent=1 // pred_check
      _
    $region7: #{tpu_custom_call.1} parent=1 // pred_check_branch
      %15 = sbr.rel (0) target = $region9
    $region8: #{tpu_custom_call.1} parent=1 // pred_region
      _
    $region9: #{tpu_custom_call.1} parent=1 // pred_fallthru
      _
    // Predicated region
    $region10: #{tpu_custom_call.1} parent=1 // pred_check
      _
    $region11: #{tpu_custom_call.1} parent=1 // pred_check_branch
      %17 = sbr.rel (0) target = $region13
    $region12: #{tpu_custom_call.1} parent=1 // pred_region
      _
    $region13: #{tpu_custom_call.1} parent=1 // pred_fallthru
      _
    %v18 = vld [vmem:[%s0] sm:$0xff]
    %v19 = vld [vmem:[%s1] sm:$0x3]
    %v20 = vld [vmem:[%s2] sm:$0xff]
    %22 = vset.pattern.permute.xlu0 0
    %23 = vperm.xlu0 %22, %v18
    %v24 = vpop.permute.xlu0 %23
    %v26 = vlaneseq
    %v27 = vshrl.u32 %v26, 7
    %v28 = vsub.s32 0, %v27
    %v29 = vrot.slane %v19, %v28
    %v30 = vmul.f32 %v24, %v29
    %31 = vset.pattern.permute.xlu0 1
    %32 = vperm.xlu0 %31, %v18
    %v33 = vpop.permute.xlu0 %32
    %v35 = vlaneseq
    %v36 = vshrl.u32 %v35, 7
    %v37 = vsub.s32 1, %v36
    %v38 = vrot.slane %v19, %v37
    %v39 = vmul.f32 %v33, %v38
    %v40 = vadd.f32 %v30, %v39
    %vm41 = vcmask 80896
    %42 = vst.msk [vmem:[#allocation2] sm:$0xff] %vm41, %v40
    %v43 = vsel %vm41, %v40, -inf
    %44 = vmax.xlane.f32.xlu0 %v43
    %v45 = vpop.xlane.xlu0 %44
    %v46 = vsub.f32 %v40, %v45
    %v47 = vmul.f32 %v46, 1.442695
    %v48 = vpow.pop %v47
    %v49 = vsel %vm41, %v48, 0.0
    %50 = vadd.xlane.f32.xlu0 %v49
    %v51 = vpop.xlane.xlu0 %50
    %v52 = vlog2.pop %v51
    %v53 = vmul.f32 %v52, 0.6931472
    %v54 = vlaneseq
    %v55 = vand.u32 %v54, 127
    %56 = vset.pattern.permute.xlu0 0
    %57 = vperm.xlu0 %56, %v20
    %v58 = vpop.permute.xlu0 %57
    %vm59 = vcmp.eq.s32.totalorder %v55, %v58
    %v60 = vsel %vm59, 1, 0
    %v61 = vcvt.s32.f32 %v60
    %v62 = vmul.f32 %v46, %v61
    %v63 = vsel %vm41, %v62, 0.0
    %64 = vadd.xlane.f32.xlu0 %v63
    %v65 = vpop.xlane.xlu0 %64
    %v66 = vsub.f32 %v53, %v65
    %vm67 = vcmask 7168
    %v68 = vsel %vm67, %v66, 0.0
    %69 = vadd.xlane.f32.xlu0 %v68
    %v70 = vpop.xlane.xlu0 %69
    %v71 = vrot.slane %v70, 4
    %v72 = vadd.f32 %v70, %v71
    %v73 = vrot.slane %v72, 2
    %v74 = vadd.f32 %v72, %v73
    %v75 = vrot.slane %v74, 1
    %v76 = vadd.f32 %v74, %v75
    %s77 = vtos %v76
    %v78 = vrcp.pop 8.0
    %s79 = vtos %v78
    %s80 = smul.f32 %s77, %s79
    %s81 = scalar_lea.smem [#allocation5], 0
    %82 = sst [smem:[%s81]] %s80
    // Predicated region
    $region14: #{tpu_custom_call.1} parent=1 // pred_check
      _
    $region15: #{tpu_custom_call.1} parent=1 // pred_check_branch
      %84 = sbr.rel (0) target = $region17
    $region16: #{tpu_custom_call.1} parent=1 // pred_region
      %s86 = ssub.s32 128, 128
      %87 = vsyncadd [#allocation3], %s86
      %s89 = sshll.u32 [#allocation2], 4
      %s90 = int_to_ptr.vmem [resolvable:$true] %s89
      %92 = dma.vmem_to_hbm [thread:$0]  %s90, 128, %s3, [#allocation3]
    $region17: #{tpu_custom_call.1} parent=1 // pred_fallthru
      _
    // Predicated region
    $region18: #{tpu_custom_call.1} parent=1 // pred_check
      _
    $region19: #{tpu_custom_call.1} parent=1 // pred_check_branch
      %94 = sbr.rel (0) target = $region21
    $region20: #{tpu_custom_call.1} parent=1 // pred_region
      %s96 = ssub.s32 16, 16
      %97 = vsyncadd [#allocation4], %s96
      %100 = dma.smem_to_hbm [#allocation5], 16, %s4, [#allocation4]
    $region21: #{tpu_custom_call.1} parent=1 // pred_fallthru
      _
    // Predicated region
    $region22: #{tpu_custom_call.1} parent=1 // pred_check
      _
    $region23: #{tpu_custom_call.1} parent=1 // pred_check_branch
      %102 = sbr.rel (0) target = $region25
    $region24: #{tpu_custom_call.1} parent=1 // pred_region
      %103 = dma.done [#allocation3], 128
    $region25: #{tpu_custom_call.1} parent=1 // pred_fallthru
      _
    // Predicated region
    $region26: #{tpu_custom_call.1} parent=1 // pred_check
      _
    $region27: #{tpu_custom_call.1} parent=1 // pred_check_branch
      %105 = sbr.rel (0) target = $region29
    $region28: #{tpu_custom_call.1} parent=1 // pred_region
      %106 = dma.done [#allocation4], 16
    $region29: #{tpu_custom_call.1} parent=1 // pred_fallthru
      _
    %107 = sfence
    %108 = vsyncpa [#allocation3], 1
    %109 = vsyncpa [#allocation4], 1

</llo_original>
